<compile_context>
chip_gen: v7x
topology: tpu7x:2x2x1
jax: 0.10.0
libtpu: 0.0.40
codegen_flags: <defaults>
</compile_context>

<pallas_src>
import functools

import jax
import jax.numpy as jnp
from jax.experimental import pallas as pl
from jax.experimental.pallas import tpu as pltpu


# ---------------- Phase 1: conv (single im2col matmul) + per-tile BN partial stats --
def _conv_stats_kernel(x_ref, h_ref, w_ref, conv_ref, stats_ref):
    # x_ref:     (1, Tt, Cin)    unpadded time tile
    # h_ref:     (1, 1, 8, Cin)  halo rows: row 0 = x[t0-1], row 1 = x[t0+Tt] (zeros at edges)
    # w_ref:     (3*Cin, Cpad)   im2col weights (tap-major rows), channels zero-padded to Cpad
    # conv_ref:  (1, Tt, Cpad)   conv output tile
    # stats_ref: (1, 1, 8, Cpad) row 0 = per-channel sum over the tile, row 1 = sum of squares
    xt = x_ref[...][0]                                           # [Tt, Cin]
    h = h_ref[...][0, 0]                                         # [8, Cin]

    # k=3 taps built on-chip (no padded copy of x in HBM, no overlapping BlockSpecs).
    x_prev = jnp.concatenate([h[0:1, :], xt[:-1, :]], axis=0)    # x[t-1]
    x_next = jnp.concatenate([xt[1:, :], h[1:2, :]], axis=0)     # x[t+1]
    x_cat = jnp.concatenate([x_prev, xt, x_next], axis=1)        # [Tt, 3*Cin]  (im2col)

    # Single MXU matmul per tile; no conv bias (cancelled by train-mode BN).
    acc = jnp.dot(x_cat, w_ref[...], preferred_element_type=jnp.float32)   # [Tt, Cpad]
    conv_ref[...] = acc[None]

    # Per-tile partial BN statistics (tiny; reduced across tiles by XLA on the host side).
    s = jnp.sum(acc, axis=0, keepdims=True)                      # [1, Cpad]
    ss = jnp.sum(acc * acc, axis=0, keepdims=True)               # [1, Cpad]
    row = jax.lax.broadcasted_iota(jnp.int32, (8, acc.shape[1]), 0)
    stats_ref[...] = jnp.where(row == 0, s, jnp.where(row == 1, ss, 0.0))[None, None]


# ---------------- Phase 2: folded BN affine (one FMA) + ELU, over flat rows ----------
def _bn_elu_kernel(c_ref, p_ref, o_ref):
    # c_ref: (Rt, Cpad) conv rows; p_ref: (2, Cpad) with row 0 = scale, row 1 = shift.
    p = p_ref[...]
    y = c_ref[...] * p[0:1, :] + p[1:2, :]
    o_ref[...] = jnp.where(y > 0, y, jnp.exp(jnp.minimum(y, 0.0)) - 1.0).astype(o_ref.dtype)


def conv_block_1d(x_nct, weight, bias, gamma, beta, *, eps=1e-5, t_tile=None):
    """ConvBlock1d forward. x_nct: [B, Cin, T]; weight: [Cout, Cin, 3] (PyTorch layout);
    returns [B, Cout, T]. Implements k=3, s=1, p=1 (module defaults).

    `bias` is accepted for API parity but not applied: a per-channel constant is
    exactly cancelled by the training-mode BatchNorm mean subtraction.
    """
    B, Cin, T = x_nct.shape
    Cout, cin_w, K = weight.shape
    assert cin_w == Cin and K == 3, "kernel implements k=3, s=1, p=1 (module defaults)"

    Cpad = ((Cout + 127) // 128) * 128            # lane-dense output channels
    f32 = jnp.float32
    budget = 8 * 1024 * 1024                      # per-pipelined-step VMEM budget (bytes)

    # Phase-1 time tile: largest divisor of T whose pipelined working set fits the budget.
    if t_tile is None:
        t_tile = T
        for cand in (1024, 512, 256, 128, 64, 32, 16, 8):
            if T % cand == 0 and 4 * cand * (2 * Cin + 3 * Cin + 3 * Cpad) <= budget:
                t_tile = cand
                break
    assert T % t_tile == 0, (T, t_tile)
    nT = T // t_tile

    x_btc = jnp.transpose(x_nct, (0, 2, 1)).astype(f32)          # [B, T, Cin] (API-layout glue)

    # Tiny halo table: halo[b,t,0] = x[b, t*Tt-1], halo[b,t,1] = x[b, (t+1)*Tt]
    # (zeros at sequence edges == the conv's zero padding).
    zrow = jnp.zeros((B, 1, Cin), f32)
    left = jnp.concatenate([zrow, x_btc[:, t_tile - 1::t_tile, :][:, : nT - 1, :]], axis=1)
    right = jnp.concatenate([x_btc[:, t_tile::t_tile, :], zrow], axis=1)
    halo = jnp.zeros((B, nT, 8, Cin), f32)
    halo = halo.at[:, :, 0, :].set(left)
    halo = halo.at[:, :, 1, :].set(right)

    # im2col weight matrix [K*Cin, Cpad] (tap-major rows); conv bias intentionally dropped.
    w_flat = jnp.transpose(weight, (2, 1, 0)).reshape(K * Cin, Cout).astype(f32)
    w_flat = jnp.pad(w_flat, ((0, 0), (0, Cpad - Cout)))

    # ---- Phase 1: conv + per-tile partial BN statistics ---------------------------
    cost1 = pl.CostEstimate(
        flops=2 * B * T * K * Cin * Cpad,
        transcendentals=0,
        bytes_accessed=4 * (B * T * Cin + B * nT * 8 * Cin + K * Cin * Cpad
                            + B * T * Cpad + B * nT * 8 * Cpad))
    conv_out, stats = pl.pallas_call(
        _conv_stats_kernel,
        grid=(B, nT),
        in_specs=[
            pl.BlockSpec((1, t_tile, Cin), lambda b, t: (b, t, 0)),
            pl.BlockSpec((1, 1, 8, Cin), lambda b, t: (b, t, 0, 0)),
            pl.BlockSpec((K * Cin, Cpad), lambda b, t: (0, 0)),
        ],
        out_specs=[
            pl.BlockSpec((1, t_tile, Cpad), lambda b, t: (b, t, 0)),
            pl.BlockSpec((1, 1, 8, Cpad), lambda b, t: (b, t, 0, 0)),
        ],
        out_shape=[
            jax.ShapeDtypeStruct((B, T, Cpad), f32),
            jax.ShapeDtypeStruct((B, nT, 8, Cpad), f32),
        ],
        compiler_params=pltpu.CompilerParams(
            dimension_semantics=("parallel", "parallel"),
            vmem_limit_bytes=32 * 1024 * 1024),
        cost_estimate=cost1,
    )(x_btc, halo, w_flat)

    # ---- Host: reduce tiny per-tile stats, fold BN affine into one FMA ------------
    n = B * T
    sums = jnp.sum(stats[:, :, 0, :], axis=(0, 1))               # [Cpad]
    sumsq = jnp.sum(stats[:, :, 1, :], axis=(0, 1))
    mean = sums / n
    # Biased variance (PyTorch train-mode BN). E[x^2]-mean^2 with a clamp; for extreme
    # dynamic range a second (x-mean)^2 pass / Welford would be numerically safer.
    var = jnp.maximum(sumsq / n - mean * mean, 0.0)
    inv = jax.lax.rsqrt(var + eps)
    gamma_p = jnp.pad(gamma.astype(f32), (0, Cpad - Cout))
    beta_p = jnp.pad(beta.astype(f32), (0, Cpad - Cout))
    scale = gamma_p * inv                                        # [Cpad]
    shift = beta_p - mean * gamma_p * inv                        # [Cpad]
    params = jnp.stack([scale, shift], axis=0)                   # [2, Cpad] (row0=scale, row1=shift)
    # TODO(synk): BatchNorm1d running_mean/running_var buffer updates (stateful training
    # side effect) are not modeled; the forward output is unaffected.

    # ---- Phase 2: folded affine + ELU over flattened rows, in place ----------------
    rows = B * T
    r_tile = rows
    if rows % 8 == 0:
        for cand in (4096, 2048, 1024, 512, 256, 128, 64, 32, 16, 8):
            if rows % cand == 0 and 16 * cand * Cpad <= budget:
                r_tile = cand
                break
    nR = rows // r_tile

    conv_flat = conv_out.reshape(rows, Cpad)
    cost2 = pl.CostEstimate(
        flops=5 * rows * Cpad,
        transcendentals=rows * Cpad,
        bytes_accessed=4 * (2 * rows * Cpad + 2 * Cpad))
    y = pl.pallas_call(
        _bn_elu_kernel,
        grid=(nR,),
        in_specs=[
            pl.BlockSpec((r_tile, Cpad), lambda r: (r, 0)),
            pl.BlockSpec((2, Cpad), lambda r: (0, 0)),
        ],
        out_specs=pl.BlockSpec((r_tile, Cpad), lambda r: (r, 0)),
        out_shape=jax.ShapeDtypeStruct((rows, Cpad), f32),
        input_output_aliases={0: 0},
        compiler_params=pltpu.CompilerParams(
            dimension_semantics=("parallel",),
            vmem_limit_bytes=32 * 1024 * 1024),
        cost_estimate=cost2,
    )(conv_flat, params)

    y = y.reshape(B, T, Cpad)[:, :, :Cout]
    return jnp.transpose(y, (0, 2, 1))                           # [B, Cout, T] (API-layout glue)


def _reference(x_nct, weight, bias, gamma, beta, *, p=1, eps=1e-5):
    # Pure-JAX reference (includes the conv bias — it must cancel under train-mode BN).
    y = jax.lax.conv_general_dilated(
        x_nct.astype(jnp.float32), weight.astype(jnp.float32),
        window_strides=(1,), padding=[(p, p)],
        dimension_numbers=("NCH", "OIH", "NCH"))
    y = y + bias.reshape(1, -1, 1)
    mean = jnp.mean(y, axis=(0, 2), keepdims=True)
    var = jnp.mean(jnp.square(y - mean), axis=(0, 2), keepdims=True)
    y = (y - mean) * jax.lax.rsqrt(var + eps)
    y = y * gamma.reshape(1, -1, 1) + beta.reshape(1, -1, 1)
    return jnp.where(y > 0, y, jnp.exp(jnp.minimum(y, 0.0)) - 1.0)


if __name__ == "__main__":
    B, Cin, Cout, T, K = 2, 4, 8, 16, 3

    key = jax.random.PRNGKey(0)
    kx, kw, kb, kg, kbe = jax.random.split(key, 5)
    x = jax.random.normal(kx, (B, Cin, T), dtype=jnp.float32)
    fan_in = Cin * K
    bound = 1.0 / (fan_in ** 0.5)
    weight = jax.random.uniform(kw, (Cout, Cin, K), minval=-bound, maxval=bound, dtype=jnp.float32)
    bias = jax.random.uniform(kb, (Cout,), minval=-bound, maxval=bound, dtype=jnp.float32)
    # Non-trivial BN affine to exercise the folded scale/shift path.
    gamma = 1.0 + 0.1 * jax.random.normal(kg, (Cout,), dtype=jnp.float32)
    beta = 0.1 * jax.random.normal(kbe, (Cout,), dtype=jnp.float32)

    # t_tile=8 -> two time tiles per batch element, so the in-kernel halo path is exercised.
    fwd = jax.jit(functools.partial(conv_block_1d, t_tile=8))
    out = jax.block_until_ready(fwd(x, weight, bias, gamma, beta))

    ref = jax.block_until_ready(_reference(x, weight, bias, gamma, beta))
    assert out.shape == (B, Cout, T), out.shape
    err = float(jnp.max(jnp.abs(out - ref)))
    assert jnp.allclose(out, ref, atol=2e-4, rtol=2e-4), err

    print("KERNEL_OK")
</pallas_src>

<mosaic_0001>
module attributes {stable_mosaic.version = 11 : i64} {
  func.func @_conv_stats_kernel(%arg0: i32, %arg1: i32, %arg2: memref<1x8x4xf32, #tpu.memory_space<vmem>>, %arg3: memref<1x1x8x4xf32, #tpu.memory_space<vmem>>, %arg4: memref<12x128xf32, #tpu.memory_space<vmem>>, %arg5: memref<1x8x128xf32, #tpu.memory_space<vmem>>, %arg6: memref<1x1x8x128xf32, #tpu.memory_space<vmem>>) attributes {dimension_semantics = [#tpu.dimension_semantics<parallel>, #tpu.dimension_semantics<parallel>], iteration_bounds = array<i64: 2, 2>, scalar_prefetch = 0 : i64, scratch_operands = 0 : i64, tpu.core_type = #tpu.core_type<tc>, window_params = [{transform_indices = @transform_0, window_bounds = array<i64: 1, 8, 4>}, {transform_indices = @transform_1, window_bounds = array<i64: 1, 1, 8, 4>}, {pipeline_mode = #tpu.pipeline_mode<synchronous>, transform_indices = @transform_2, window_bounds = array<i64: 12, 128>}, {transform_indices = @transform_3, window_bounds = array<i64: 1, 8, 128>}, {transform_indices = @transform_4, window_bounds = array<i64: 1, 1, 8, 128>}]} {
    %c0 = arith.constant 0 : index
    %c0_0 = arith.constant 0 : index
    %c0_1 = arith.constant 0 : index
    %0 = vector.load %arg2[%c0, %c0_0, %c0_1] : memref<1x8x4xf32, #tpu.memory_space<vmem>>, vector<1x8x4xf32>
    %1 = vector.shape_cast %0 : vector<1x8x4xf32> to vector<8x4xf32>
    %c0_2 = arith.constant 0 : index
    %c0_3 = arith.constant 0 : index
    %c0_4 = arith.constant 0 : index
    %c0_5 = arith.constant 0 : index
    %2 = vector.load %arg3[%c0_2, %c0_3, %c0_4, %c0_5] : memref<1x1x8x4xf32, #tpu.memory_space<vmem>>, vector<1x1x8x4xf32>
    %3 = vector.shape_cast %2 : vector<1x1x8x4xf32> to vector<8x4xf32>
    %4 = vector.extract_strided_slice %3 {offsets = [0, 0], sizes = [1, 4], strides = [1, 1]} : vector<8x4xf32> to vector<1x4xf32>
    %5 = vector.extract_strided_slice %1 {offsets = [0, 0], sizes = [7, 4], strides = [1, 1]} : vector<8x4xf32> to vector<7x4xf32>
    %6 = tpu.concatenate %4, %5 in 0 : vector<1x4xf32>, vector<7x4xf32> -> vector<8x4xf32>
    %7 = vector.extract_strided_slice %1 {offsets = [1, 0], sizes = [7, 4], strides = [1, 1]} : vector<8x4xf32> to vector<7x4xf32>
    %8 = vector.extract_strided_slice %3 {offsets = [1, 0], sizes = [1, 4], strides = [1, 1]} : vector<8x4xf32> to vector<1x4xf32>
    %9 = tpu.concatenate %7, %8 in 0 : vector<7x4xf32>, vector<1x4xf32> -> vector<8x4xf32>
    %10 = tpu.concatenate %6, %1, %9 in 1 : vector<8x4xf32>, vector<8x4xf32>, vector<8x4xf32> -> vector<8x12xf32>
    %c0_6 = arith.constant 0 : index
    %c0_7 = arith.constant 0 : index
    %11 = vector.load %arg4[%c0_6, %c0_7] : memref<12x128xf32, #tpu.memory_space<vmem>>, vector<12x128xf32>
    %cst = arith.constant dense<0.000000e+00> : vector<8x128xf32>
    %12 = tpu.matmul %10, %11, %cst {dimension_numbers = #tpu.dot_dimension_numbers<[1], [0], [0], [1], [0, 0, 1, 1], [], []>} : vector<8x12xf32>, vector<12x128xf32>, vector<8x128xf32> -> vector<8x128xf32>
    %13 = vector.shape_cast %12 : vector<8x128xf32> to vector<1x8x128xf32>
    %c0_8 = arith.constant 0 : index
    %c0_9 = arith.constant 0 : index
    %c0_10 = arith.constant 0 : index
    %14 = vector.load %arg5[%c0_8, %c0_9, %c0_10] : memref<1x8x128xf32, #tpu.memory_space<vmem>>, vector<1x8x128xf32>
    tpu.vector_store %arg5[%c0_8, %c0_9, %c0_10], %13 {strides = array<i32>} : memref<1x8x128xf32, #tpu.memory_space<vmem>>, vector<1x8x128xf32>,
    %cst_11 = arith.constant dense<0.000000e+00> : vector<128xf32>
    %15 = vector.multi_reduction <add>, %12, %cst_11 [0] : vector<8x128xf32> to vector<128xf32>
    %16 = vector.shape_cast %15 : vector<128xf32> to vector<1x128xf32>
    %17 = arith.mulf %12, %12 : vector<8x128xf32>
    %cst_12 = arith.constant dense<0.000000e+00> : vector<128xf32>
    %18 = vector.multi_reduction <add>, %17, %cst_12 [0] : vector<8x128xf32> to vector<128xf32>
    %19 = vector.shape_cast %18 : vector<128xf32> to vector<1x128xf32>
    %20 = tpu.iota {dimensions = array<i32: 0>} : vector<8x128xi32>
    %c0_i32 = arith.constant 0 : i32
    %21 = vector.broadcast %c0_i32 : i32 to vector<8x128xi32>
    %22 = arith.cmpi eq, %20, %21 : vector<8x128xi32>
    %c1_i32 = arith.constant 1 : i32
    %23 = vector.broadcast %c1_i32 : i32 to vector<8x128xi32>
    %24 = arith.cmpi eq, %20, %23 : vector<8x128xi32>
    %cst_13 = arith.constant 0.000000e+00 : f32
    %25 = vector.shape_cast %19 : vector<1x128xf32> to vector<1x128xf32>
    %26 = vector.broadcast %25 : vector<1x128xf32> to vector<8x128xf32>
    %27 = vector.broadcast %cst_13 : f32 to vector<8x128xf32>
    %28 = arith.select %24, %26, %27 : vector<8x128xi1>, vector<8x128xf32>
    %29 = vector.shape_cast %16 : vector<1x128xf32> to vector<1x128xf32>
    %30 = vector.broadcast %29 : vector<1x128xf32> to vector<8x128xf32>
    %31 = arith.select %22, %30, %28 : vector<8x128xi1>, vector<8x128xf32>
    %32 = vector.shape_cast %31 : vector<8x128xf32> to vector<1x1x8x128xf32>
    %c0_14 = arith.constant 0 : index
    %c0_15 = arith.constant 0 : index
    %c0_16 = arith.constant 0 : index
    %c0_17 = arith.constant 0 : index
    %33 = vector.load %arg6[%c0_14, %c0_15, %c0_16, %c0_17] : memref<1x1x8x128xf32, #tpu.memory_space<vmem>>, vector<1x1x8x128xf32>
    tpu.vector_store %arg6[%c0_14, %c0_15, %c0_16, %c0_17], %32 {strides = array<i32>} : memref<1x1x8x128xf32, #tpu.memory_space<vmem>>, vector<1x1x8x128xf32>,
    return
  }
  func.func @transform_0(%arg0: i32, %arg1: i32) -> (i32, i32, i32) {
    %c0_i32 = arith.constant 0 : i32
    %c0_i32_0 = arith.constant 0 : i32
    return %arg0, %arg1, %c0_i32 : i32, i32, i32
  }
  func.func @transform_1(%arg0: i32, %arg1: i32) -> (i32, i32, i32, i32) {
    %c0_i32 = arith.constant 0 : i32
    %c0_i32_0 = arith.constant 0 : i32
    %c0_i32_1 = arith.constant 0 : i32
    return %arg0, %arg1, %c0_i32, %c0_i32_0 : i32, i32, i32, i32
  }
  func.func @transform_2(%arg0: i32, %arg1: i32) -> (i32, i32) {
    %c0_i32 = arith.constant 0 : i32
    %c0_i32_0 = arith.constant 0 : i32
    %c0_i32_1 = arith.constant 0 : i32
    return %c0_i32, %c0_i32_0 : i32, i32
  }
  func.func @transform_3(%arg0: i32, %arg1: i32) -> (i32, i32, i32) {
    %c0_i32 = arith.constant 0 : i32
    %c0_i32_0 = arith.constant 0 : i32
    return %arg0, %arg1, %c0_i32 : i32, i32, i32
  }
  func.func @transform_4(%arg0: i32, %arg1: i32) -> (i32, i32, i32, i32) {
    %c0_i32 = arith.constant 0 : i32
    %c0_i32_0 = arith.constant 0 : i32
    %c0_i32_1 = arith.constant 0 : i32
    return %arg0, %arg1, %c0_i32, %c0_i32_0 : i32, i32, i32, i32
  }
}

module attributes {stable_mosaic.version = 11 : i64} {
  func.func @_bn_elu_kernel(%arg0: i32, %arg1: memref<32x128xf32, #tpu.memory_space<vmem>>, %arg2: memref<2x128xf32, #tpu.memory_space<vmem>>, %arg3: memref<32x128xf32, #tpu.memory_space<vmem>>) attributes {dimension_semantics = [#tpu.dimension_semantics<parallel>], iteration_bounds = array<i64: 1>, scalar_prefetch = 0 : i64, scratch_operands = 0 : i64, tpu.core_type = #tpu.core_type<tc>, window_params = [{transform_indices = @transform_0, window_bounds = array<i64: 32, 128>}, {pipeline_mode = #tpu.pipeline_mode<synchronous>, transform_indices = @transform_1, window_bounds = array<i64: 2, 128>}, {transform_indices = @transform_2, window_bounds = array<i64: 32, 128>}]} {
    %c0 = arith.constant 0 : index
    %c0_0 = arith.constant 0 : index
    %0 = vector.load %arg2[%c0, %c0_0] : memref<2x128xf32, #tpu.memory_space<vmem>>, vector<2x128xf32>
    %c0_1 = arith.constant 0 : index
    %c0_2 = arith.constant 0 : index
    %1 = vector.load %arg1[%c0_1, %c0_2] : memref<32x128xf32, #tpu.memory_space<vmem>>, vector<32x128xf32>
    %2 = vector.extract_strided_slice %0 {offsets = [0, 0], sizes = [1, 128], strides = [1, 1]} : vector<2x128xf32> to vector<1x128xf32>
    %3 = vector.broadcast %2 : vector<1x128xf32> to vector<32x128xf32>
    %4 = arith.mulf %1, %3 : vector<32x128xf32>
    %5 = vector.extract_strided_slice %0 {offsets = [1, 0], sizes = [1, 128], strides = [1, 1]} : vector<2x128xf32> to vector<1x128xf32>
    %6 = vector.broadcast %5 : vector<1x128xf32> to vector<32x128xf32>
    %7 = arith.addf %4, %6 : vector<32x128xf32>
    %cst = arith.constant 0.000000e+00 : f32
    %8 = vector.broadcast %cst : f32 to vector<32x128xf32>
    %9 = arith.cmpf ogt, %7, %8 : vector<32x128xf32>
    %cst_3 = arith.constant 0.000000e+00 : f32
    %10 = vector.broadcast %cst_3 : f32 to vector<32x128xf32>
    %11 = arith.minimumf %7, %10 : vector<32x128xf32>
    %12 = math.exp %11 : vector<32x128xf32>
    %cst_4 = arith.constant 1.000000e+00 : f32
    %13 = vector.broadcast %cst_4 : f32 to vector<32x128xf32>
    %14 = arith.subf %12, %13 : vector<32x128xf32>
    %15 = arith.select %9, %7, %14 : vector<32x128xi1>, vector<32x128xf32>
    %c0_5 = arith.constant 0 : index
    %c0_6 = arith.constant 0 : index
    %16 = vector.load %arg3[%c0_5, %c0_6] : memref<32x128xf32, #tpu.memory_space<vmem>>, vector<32x128xf32>
    tpu.vector_store %arg3[%c0_5, %c0_6], %15 {strides = array<i32>} : memref<32x128xf32, #tpu.memory_space<vmem>>, vector<32x128xf32>,
    return
  }
  func.func @transform_0(%arg0: i32) -> (i32, i32) {
    %c0_i32 = arith.constant 0 : i32
    %c0_i32_0 = arith.constant 0 : i32
    return %arg0, %c0_i32 : i32, i32
  }
  func.func @transform_1(%arg0: i32) -> (i32, i32) {
    %c0_i32 = arith.constant 0 : i32
    %c0_i32_0 = arith.constant 0 : i32
    %c0_i32_1 = arith.constant 0 : i32
    return %c0_i32, %c0_i32_0 : i32, i32
  }
  func.func @transform_2(%arg0: i32) -> (i32, i32) {
    %c0_i32 = arith.constant 0 : i32
    %c0_i32_0 = arith.constant 0 : i32
    return %arg0, %c0_i32 : i32, i32
  }
}

</mosaic_0001>

<llo_original>
// kernel: conv_block_1d.3
$region0: #{conv_block_1d.3}
  #allocation0 [shape = 'u32[]', space=smem, size = 0x4, offset = 0x4, fixed_abs, tag = 'smem constant byte address 0x4 - core index']
  #allocation1 [shape = 'u32[144,128]{1,0:T(1,128)}', space=vmem, size = 0x12000, scoped, tag = 'internal scratch']
  %s0 = inlined_call_operand.vmem [shape: f32[32,128], index: 0, kind: input, shape index: {}, may-alias: {0,2}]
  %s1 = inlined_call_operand.vmem [shape: f32[2,128], index: 1, kind: input, shape index: {}]
  %s2 = inlined_call_operand.vmem [shape: f32[32,128], index: 2, kind: output, shape index: {}, may-alias: {0,2}]
  %s3 = sld [smem:[#allocation0]]
  $region18: #{conv_block_1d.3} parent=0
    _
  %s5 = ssub.s32 1, %s3
  %s6 = scalar_select 0, %s5, %s3
  // Predicated region
  $region2: #{conv_block_1d.3} parent=0 // pred_check
    _
  $region3: #{conv_block_1d.3} parent=0 // pred_check_branch
    %8 = sbr.rel (0) target = $region5
  $region4: #{conv_block_1d.3} parent=0 // pred_region
    _
  $region5: #{conv_block_1d.3} parent=0 // pred_fallthru
    _
  // Predicated region
  $region6: #{conv_block_1d.3} parent=0 // pred_check
    _
  $region7: #{conv_block_1d.3} parent=0 // pred_check_branch
    %10 = sbr.rel (0) target = $region9
  $region8: #{conv_block_1d.3} parent=0 // pred_region
    _
  $region9: #{conv_block_1d.3} parent=0 // pred_fallthru
    _
  %v11 = vld [vmem:[%s1] sm:$0x3]
  %v12 = vld [vmem:[%s0] sm:$0xff]
  %v13 = vld [vmem:[%s0 + $0x8] sm:$0xff]
  %v14 = vld [vmem:[%s0 + $0x10] sm:$0xff]
  %v15 = vld [vmem:[%s0 + $0x18] sm:$0xff]
  %v16 = vlaneseq
  %v17 = vshrl.u32 %v16, 7
  %v18 = vsub.s32 0, %v17
  %v19 = vrot.slane %v11, %v18
  %v20 = vmul.f32 %v12, %v19
  %v21 = vmul.f32 %v13, %v19
  %v22 = vmul.f32 %v14, %v19
  %v23 = vmul.f32 %v15, %v19
  %v24 = vlaneseq
  %v25 = vshrl.u32 %v24, 7
  %v26 = vsub.s32 1, %v25
  %v27 = vrot.slane %v11, %v26
  %v28 = vadd.f32 %v20, %v27
  %v29 = vadd.f32 %v21, %v27
  %v30 = vadd.f32 %v22, %v27
  %v31 = vadd.f32 %v23, %v27
  %vm32 = vcmp.gt.f32.partialorder %v28, 0.0
  %vm33 = vcmp.gt.f32.partialorder %v29, 0.0
  %vm34 = vcmp.gt.f32.partialorder %v30, 0.0
  %vm35 = vcmp.gt.f32.partialorder %v31, 0.0
  %v36 = vmin.f32 %v28, 0.0
  %v37 = vmin.f32 %v29, 0.0
  %v38 = vmin.f32 %v30, 0.0
  %v39 = vmin.f32 %v31, 0.0
  %v40 = vmul.f32 %v36, 1.442695
  %v41 = vpow.pop %v40
  %v42 = vmul.f32 %v37, 1.442695
  %v43 = vpow.pop %v42
  %v44 = vmul.f32 %v38, 1.442695
  %v45 = vpow.pop %v44
  %v46 = vmul.f32 %v39, 1.442695
  %v47 = vpow.pop %v46
  %v48 = vsub.f32 %v41, 1.0
  %v49 = vsub.f32 %v43, 1.0
  %v50 = vsub.f32 %v45, 1.0
  %v51 = vsub.f32 %v47, 1.0
  %v52 = vsel %vm32, %v28, %v48
  %v53 = vsel %vm33, %v29, %v49
  %v54 = vsel %vm34, %v30, %v50
  %v55 = vsel %vm35, %v31, %v51
  %56 = vst [vmem:[%s2] sm:$0xff] %v52
  %57 = vst [vmem:[%s2 + $0x8] sm:$0xff] %v53
  %58 = vst [vmem:[%s2 + $0x10] sm:$0xff] %v54
  %59 = vst [vmem:[%s2 + $0x18] sm:$0xff] %v55
  // Predicated region
  $region10: #{conv_block_1d.3} parent=0 // pred_check
    _
  $region11: #{conv_block_1d.3} parent=0 // pred_check_branch
    %61 = sbr.rel (0) target = $region13
  $region12: #{conv_block_1d.3} parent=0 // pred_region
    _
  $region13: #{conv_block_1d.3} parent=0 // pred_fallthru
    _
  // Predicated region
  $region14: #{conv_block_1d.3} parent=0 // pred_check
    _
  $region15: #{conv_block_1d.3} parent=0 // pred_check_branch
    %63 = sbr.rel (0) target = $region17
  $region16: #{conv_block_1d.3} parent=0 // pred_region
    _
  $region17: #{conv_block_1d.3} parent=0 // pred_fallthru
    _

// kernel: conv_block_1d.2
$region0: #{conv_block_1d.2}
  #allocation0 [shape = 'u32[]', space=smem, size = 0x4, offset = 0x4, fixed_abs, tag = 'smem constant byte address 0x4 - core index']
  #allocation1 [shape = 'u32[144,128]{1,0:T(1,128)}', space=vmem, size = 0x12000, scoped, tag = 'internal scratch']
  %s0 = inlined_call_operand.vmem [shape: f32[2,16,4], index: 0, kind: input, shape index: {}]
  %s1 = inlined_call_operand.vmem [shape: f32[2,2,8,4], index: 1, kind: input, shape index: {}]
  %s2 = inlined_call_operand.vmem [shape: f32[12,128], index: 2, kind: input, shape index: {}]
  %s3 = inlined_call_operand.vmem [shape: f32[2,16,128], index: 3, kind: output, shape index: {0}]
  %s4 = inlined_call_operand.vmem [shape: f32[2,2,8,128], index: 4, kind: output, shape index: {1}]
  %5 = xla_tuple %s3, %s4
  %s6 = sld [smem:[#allocation0]]
  $region53: #{conv_block_1d.2} parent=0
    _
  %s8 = ssub.s32 1, %s6
  %s9 = scalar_select 0, %s8, %s6
  loop: start=0, step=1, limit=6
  $region2: #{conv_block_1d.2} parent=0 // loop_pre_header
    _
  $region3: #{conv_block_1d.2} parent=0 // loop_header
    %s11 = sphi 0, %s15
    %p12 = scmp.ge.s32.totalorder %s11, 6
    %s18 = sphi 0, %s30
    %s19 = sphi 0, %s26
    %s20 = sphi 0, %s18
    %s21 = sphi 0, %s19
    %s22 = sphi 0, %s20
    %s23 = sphi 0, %s21
    %s35 = sphi 0, %s37
    %s38 = sphi 0, %s35
    %s39 = sphi 0, %s38
    %s55 = sphi 0, %s39
    %s63 = sphi 0, %s65
    %s66 = sphi 0, %s63
    %s67 = sphi 0, %s66
    %s83 = sphi 0, %s67
    %s87 = sphi 0, %s87
    %s89 = sphi 0, %s87
    %s90 = sphi 0, %s89
    %s104 = sphi 0, %s90
    %s112 = sphi 0, %s114
    %s115 = sphi 0, %s112
    %s116 = sphi 0, %s115
    %s132 = sphi 0, %s116
    %s140 = sphi 0, %s142
    %s143 = sphi 0, %s140
    %s144 = sphi 0, %s143
    %s160 = sphi 0, %s144
  $region4: #{conv_block_1d.2} parent=0 // loop_header_branch
    %14 = sbr.rel (%p12) target = $region8
  $region5: #{conv_block_1d.2} parent=0 // loop_body
    %s16 = ssub.s32 %s11, 1
    %s17 = ssub.s32 %s11, 2
    %s24 = sadd.s32 1, %s19
    %p25 = scmp.ge.s32.totalorder %s24, 2
    %s26 = scalar_select %p25, 0, %s24
    %s27 = sadd.s32 1, %s18
    %s28 = scalar_select %p25, %s27, %s18
    %p29 = scmp.ge.s32.totalorder %s28, 2
    %s30 = scalar_select %p29, 0, %s28
    %s31 = ssub.s32 %s18, %s30
    %s32 = ssub.s32 %s19, %s26
    %s33 = sor.u32 %s31, %s32
    %p34 = scmp.eq.s32.totalorder %s33, 0
    %s36 = sadd.s32 %s35, 1
    %s37 = scalar_select %p34, %s35, %s36
    %p40 = pneg %p34
    %p41 = scmp.eq.s32.totalorder %s11, 3
    %p42 = por %p40, %p41
    %p43 = scmp.ne.s32.totalorder %s35, %s38
    %p44 = scmp.eq.s32.totalorder %s11, 0
    %p45 = por %p43, %p44
    %p46 = scmp.ne.s32.totalorder %s35, %s38
    %p47 = scmp.eq.s32.totalorder %s16, 3
    %p48 = por %p46, %p47
    %p49 = scmp.ne.s32.totalorder %s38, %s39
    %p50 = scmp.eq.s32.totalorder %s16, 0
    %p51 = por %p49, %p50
    %p52 = scmp.ne.s32.totalorder %s38, %s39
    %p53 = scmp.eq.s32.totalorder %s17, 3
    %p54 = por %p52, %p53
    %p56 = scmp.ne.s32.totalorder %s39, %s55
    %p57 = scmp.eq.s32.totalorder %s17, 0
    %p58 = por %p56, %p57
    %s59 = ssub.s32 %s18, %s30
    %s60 = ssub.s32 %s19, %s26
    %s61 = sor.u32 %s59, %s60
    %p62 = scmp.eq.s32.totalorder %s61, 0
    %s64 = sadd.s32 %s63, 1
    %s65 = scalar_select %p62, %s63, %s64
    %p68 = pneg %p62
    %p69 = scmp.eq.s32.totalorder %s11, 3
    %p70 = por %p68, %p69
    %p71 = scmp.ne.s32.totalorder %s63, %s66
    %p72 = scmp.eq.s32.totalorder %s11, 0
    %p73 = por %p71, %p72
    %p74 = scmp.ne.s32.totalorder %s63, %s66
    %p75 = scmp.eq.s32.totalorder %s16, 3
    %p76 = por %p74, %p75
    %p77 = scmp.ne.s32.totalorder %s66, %s67
    %p78 = scmp.eq.s32.totalorder %s16, 0
    %p79 = por %p77, %p78
    %p80 = scmp.ne.s32.totalorder %s66, %s67
    %p81 = scmp.eq.s32.totalorder %s17, 3
    %p82 = por %p80, %p81
    %p84 = scmp.ne.s32.totalorder %s67, %s83
    %p85 = scmp.eq.s32.totalorder %s17, 0
    %p86 = por %p84, %p85
    %s88 = sadd.s32 %s87, 1
    %p91 = scmp.eq.s32.totalorder %s11, 3
    %p92 = scmp.ne.s32.totalorder %s87, %s89
    %p93 = scmp.eq.s32.totalorder %s11, 0
    %p94 = por %p92, %p93
    %p95 = scmp.ne.s32.totalorder %s87, %s89
    %p96 = scmp.eq.s32.totalorder %s16, 3
    %p97 = por %p95, %p96
    %p98 = scmp.ne.s32.totalorder %s89, %s90
    %p99 = scmp.eq.s32.totalorder %s16, 0
    %p100 = por %p98, %p99
    %p101 = scmp.ne.s32.totalorder %s89, %s90
    %p102 = scmp.eq.s32.totalorder %s17, 3
    %p103 = por %p101, %p102
    %p105 = scmp.ne.s32.totalorder %s90, %s104
    %p106 = scmp.eq.s32.totalorder %s17, 0
    %p107 = por %p105, %p106
    %s108 = ssub.s32 %s18, %s30
    %s109 = ssub.s32 %s19, %s26
    %s110 = sor.u32 %s108, %s109
    %p111 = scmp.eq.s32.totalorder %s110, 0
    %s113 = sadd.s32 %s112, 1
    %s114 = scalar_select %p111, %s112, %s113
    %p117 = pneg %p111
    %p118 = scmp.eq.s32.totalorder %s11, 3
    %p119 = por %p117, %p118
    %p120 = scmp.ne.s32.totalorder %s112, %s115
    %p121 = scmp.eq.s32.totalorder %s11, 0
    %p122 = por %p120, %p121
    %p123 = scmp.ne.s32.totalorder %s112, %s115
    %p124 = scmp.eq.s32.totalorder %s16, 3
    %p125 = por %p123, %p124
    %p126 = scmp.ne.s32.totalorder %s115, %s116
    %p127 = scmp.eq.s32.totalorder %s16, 0
    %p128 = por %p126, %p127
    %p129 = scmp.ne.s32.totalorder %s115, %s116
    %p130 = scmp.eq.s32.totalorder %s17, 3
    %p131 = por %p129, %p130
    %p133 = scmp.ne.s32.totalorder %s116, %s132
    %p134 = scmp.eq.s32.totalorder %s17, 0
    %p135 = por %p133, %p134
    %s136 = ssub.s32 %s18, %s30
    %s137 = ssub.s32 %s19, %s26
    %s138 = sor.u32 %s136, %s137
    %p139 = scmp.eq.s32.totalorder %s138, 0
    %s141 = sadd.s32 %s140, 1
    %s142 = scalar_select %p139, %s140, %s141
    %p145 = pneg %p139
    %p146 = scmp.eq.s32.totalorder %s11, 3
    %p147 = por %p145, %p146
    %p148 = scmp.ne.s32.totalorder %s140, %s143
    %p149 = scmp.eq.s32.totalorder %s11, 0
    %p150 = por %p148, %p149
    %p151 = scmp.ne.s32.totalorder %s140, %s143
    %p152 = scmp.eq.s32.totalorder %s16, 3
    %p153 = por %p151, %p152
    %p154 = scmp.ne.s32.totalorder %s143, %s144
    %p155 = scmp.eq.s32.totalorder %s16, 0
    %p156 = por %p154, %p155
    %p157 = scmp.ne.s32.totalorder %s143, %s144
    %p158 = scmp.eq.s32.totalorder %s17, 3
    %p159 = por %p157, %p158
    %p161 = scmp.ne.s32.totalorder %s144, %s160
    %p162 = scmp.eq.s32.totalorder %s17, 0
    %p163 = por %p161, %p162
    %p164 = scmp.le.s32.totalorder 1, %s11
    %p165 = scmp.lt.s32.totalorder %s11, 5
    %p166 = pnand %p164, %p165
    %p167 = pneg %p166
    // Predicated region
    $region9: #{conv_block_1d.2} parent=5 // pred_check
      _
    $region10: #{conv_block_1d.2} parent=5 // pred_check_branch
      %169 = sbr.rel (%p166) target = $region12
    $region11: #{conv_block_1d.2} parent=5 // pred_region
      %s170 = ssub.s32 %s11, 1
      // Predicated region
      $region13: #{conv_block_1d.2} parent=11 // pred_check
        %p171 = pneg %p100
      $region14: #{conv_block_1d.2} parent=11 // pred_check_branch
        %173 = sbr.rel (%p171) target = $region16
      $region15: #{conv_block_1d.2} parent=11 // pred_region
        _
      $region16: #{conv_block_1d.2} parent=11 // pred_fallthru
        _
    $region12: #{conv_block_1d.2} parent=5 // pred_fallthru
      _
    %p174 = scmp.lt.s32.totalorder %s11, 4
    // Predicated region
    $region17: #{conv_block_1d.2} parent=5 // pred_check
      %p175 = pneg %p174
    $region18: #{conv_block_1d.2} parent=5 // pred_check_branch
      %177 = sbr.rel (%p175) target = $region20
    $region19: #{conv_block_1d.2} parent=5 // pred_region
      // Predicated region
      $region21: #{conv_block_1d.2} parent=19 // pred_check
        %p178 = pneg %p45
      $region22: #{conv_block_1d.2} parent=19 // pred_check_branch
        %180 = sbr.rel (%p178) target = $region24
      $region23: #{conv_block_1d.2} parent=19 // pred_region
        %p181 = scmp.lt.s32.totalorder %s18, 1
        %s182 = scalar_select %p181, %s18, 1
        %p183 = scmp.lt.s32.totalorder %s19, 1
        %s184 = scalar_select %p183, %s19, 1
        %s185 = smul.addr %s182, 2
        %s186 = sadd.s32 %s184, %s185
        %s187 = smul.addr %s186, 8
        %s188 = scalar_lea.vmem %s0, %s187
      $region24: #{conv_block_1d.2} parent=19 // pred_fallthru
        _
      // Predicated region
      $region25: #{conv_block_1d.2} parent=19 // pred_check
        %p189 = pneg %p73
      $region26: #{conv_block_1d.2} parent=19 // pred_check_branch
        %191 = sbr.rel (%p189) target = $region28
      $region27: #{conv_block_1d.2} parent=19 // pred_region
        %p192 = scmp.lt.s32.totalorder %s18, 1
        %s193 = scalar_select %p192, %s18, 1
        %p194 = scmp.lt.s32.totalorder %s19, 1
        %s195 = scalar_select %p194, %s19, 1
        %s196 = smul.addr %s193, 2
        %s197 = sadd.s32 %s195, %s196
        %s198 = smul.addr %s197, 8
        %s199 = scalar_lea.vmem %s1, %s198
      $region28: #{conv_block_1d.2} parent=19 // pred_fallthru
        _
    $region20: #{conv_block_1d.2} parent=5 // pred_fallthru
      _
    %p200 = scmp.le.s32.totalorder 1, %s11
    %p201 = scmp.lt.s32.totalorder %s11, 5
    %p202 = pnand %p200, %p201
    %p203 = pneg %p202
    // Predicated region
    $region29: #{conv_block_1d.2} parent=5 // pred_check
      _
    $region30: #{conv_block_1d.2} parent=5 // pred_check_branch
      %205 = sbr.rel (%p202) target = $region32
    $region31: #{conv_block_1d.2} parent=5 // pred_region
      %s206 = ssub.s32 %s11, 1
      %p207 = scmp.lt.s32.totalorder %s20, 1
      %s208 = scalar_select %p207, %s20, 1
      %p209 = scmp.lt.s32.totalorder %s21, 1
      %s210 = scalar_select %p209, %s21, 1
      %s211 = smul.addr %s208, 2
      %s212 = sadd.s32 %s210, %s211
      %s213 = smul.addr %s212, 8
      %s214 = scalar_lea.vmem %s0, %s213
      %p215 = pneg %p51
      %p216 = pneg %p48
      %p217 = scmp.lt.s32.totalorder %s20, 1
      %s218 = scalar_select %p217, %s20, 1
      %p219 = scmp.lt.s32.totalorder %s21, 1
      %s220 = scalar_select %p219, %s21, 1
      %s221 = smul.addr %s218, 2
      %s222 = sadd.s32 %s220, %s221
      %s223 = smul.addr %s222, 8
      %s224 = scalar_lea.vmem %s1, %s223
      %p225 = pneg %p79
      %p226 = pneg %p76
      %p227 = pneg %p100
      %p228 = pneg %p97
      %p229 = pneg %p128
      %p230 = pneg %p125
      %p231 = scmp.lt.s32.totalorder %s20, 1
      %s232 = scalar_select %p231, %s20, 1
      %p233 = scmp.lt.s32.totalorder %s21, 1
      %s234 = scalar_select %p233, %s21, 1
      %s235 = smul.addr %s232, 2
      %s236 = sadd.s32 %s234, %s235
      %s237 = smul.addr %s236, 8
      %s238 = scalar_lea.vmem %s3, %s237
      %p239 = pneg %p156
      %p240 = pneg %p153
      %p241 = scmp.lt.s32.totalorder %s20, 1
      %s242 = scalar_select %p241, %s20, 1
      %p243 = scmp.lt.s32.totalorder %s21, 1
      %s244 = scalar_select %p243, %s21, 1
      %s245 = smul.addr %s242, 2
      %s246 = sadd.s32 %s244, %s245
      %s247 = smul.addr %s246, 8
      %s248 = scalar_lea.vmem %s4, %s247
      %p249 = scmp.lt.s32.totalorder %s20, 1
      %s250 = scalar_select %p249, %s20, 1
      %p251 = scmp.lt.s32.totalorder %s21, 1
      %s252 = scalar_select %p251, %s21, 1
      %s253 = smul.addr %s250, 2
      %s254 = sadd.s32 %s252, %s253
      %s255 = smul.addr %s254, 8
      %s256 = scalar_lea.vmem %s0, %s255
      %p257 = scmp.lt.s32.totalorder %s20, 1
      %s258 = scalar_select %p257, %s20, 1
      %p259 = scmp.lt.s32.totalorder %s21, 1
      %s260 = scalar_select %p259, %s21, 1
      %s261 = smul.addr %s258, 2
      %s262 = sadd.s32 %s260, %s261
      %s263 = smul.addr %s262, 8
      %s264 = scalar_lea.vmem %s1, %s263
      %p265 = scmp.lt.s32.totalorder %s20, 1
      %s266 = scalar_select %p265, %s20, 1
      %p267 = scmp.lt.s32.totalorder %s21, 1
      %s268 = scalar_select %p267, %s21, 1
      %s269 = smul.addr %s266, 2
      %s270 = sadd.s32 %s268, %s269
      %s271 = smul.addr %s270, 8
      %s272 = scalar_lea.vmem %s3, %s271
      %p273 = scmp.lt.s32.totalorder %s20, 1
      %s274 = scalar_select %p273, %s20, 1
      %p275 = scmp.lt.s32.totalorder %s21, 1
      %s276 = scalar_select %p275, %s21, 1
      %s277 = smul.addr %s274, 2
      %s278 = sadd.s32 %s276, %s277
      %s279 = smul.addr %s278, 8
      %s280 = scalar_lea.vmem %s4, %s279
      %v281 = vld [vmem:[%s256] sm:$0xff]
      %v282 = vld [vmem:[%s264] sm:$0xff]
      %v284 = vrot.slane %v281, 7
      %vm286 = vcmask 1040384
      %v287 = vsel %vm286, %v282, %v284
      %v288 = vrot.slane %v281, 1
      %v291 = vrot.slane %v282, 2
      %vm293 = vcmask 1046528
      %v294 = vsel %vm293, %v288, %v291
      %295 = vrot.lane.b32.xlu0 %v281, 4
      %v296 = vpop.permute.xlu0 %295
      %299 = vrot.lane.b32.xlu0 %v294, 8
      %v300 = vpop.permute.xlu0 %299
      %vm302 = vcmask 31744
      %v303 = vsel %vm302, %v287, %v296
      %vm304 = vcmask 64512
      %v305 = vsel %vm304, %v303, %v300
      %v306 = vld [vmem:[%s2] sm:$0xff]
      %v307 = vld [vmem:[%s2 + $0x8] sm:$0xf]
      %vm308 = vcmask 97280
      %v310 = vsel %vm308, %v305, 0
      %vm312 = vcmask 1043456
      %v314 = vsel %vm312, %v307, 0
      %316 = vmatprep.subr.mxu0 0.0
      %317 = vmatpush1.msra.mxu0 %v306
      %318 = vmatprep.subr.mxu0 0.0
      %319 = vmatpush1.msra.mxu0 %v314
      %320 = vmatprep.subr.mxu0 0.0
      %321 = vmatpush1.msra.mxu0 0.0
      %322 = vmatprep.subr.mxu0 0.0
      %323 = vmatpush1.msra.mxu0 0.0
      %324 = vmatprep.subr.mxu0 0.0
      %325 = vmatpush1.msra.mxu0 0.0
      %326 = vmatprep.subr.mxu0 0.0
      %327 = vmatpush1.msra.mxu0 0.0
      %328 = vmatprep.subr.mxu0 0.0
      %329 = vmatpush1.msra.mxu0 0.0
      %330 = vmatprep.subr.mxu0 0.0
      %331 = vmatpush1.msra.mxu0 0.0
      %332 = vmatprep.subr.mxu0 0.0
      %333 = vmatpush1.msra.mxu0 0.0
      %334 = vmatprep.subr.mxu0 0.0
      %335 = vmatpush1.msra.mxu0 0.0
      %336 = vmatprep.subr.mxu0 0.0
      %337 = vmatpush1.msra.mxu0 0.0
      %338 = vmatprep.subr.mxu0 0.0
      %339 = vmatpush1.msra.mxu0 0.0
      %340 = vmatprep.subr.mxu0 0.0
      %341 = vmatpush1.msra.mxu0 0.0
      %342 = vmatprep.subr.mxu0 0.0
      %343 = vmatpush1.msra.mxu0 0.0
      %344 = vmatprep.subr.mxu0 0.0
      %345 = vmatpush1.msra.mxu0 0.0
      %346 = vmatprep.subr.mxu0 0.0
      %347 = vmatpush1.msra.mxu0 0.0
      %348 = vmatprep.subr.mxu0 0.0
      %349 = vmatpush1.msra.mxu0 0.0
      %350 = vmatprep.subr.mxu0 0.0
      %351 = vmatpush1.msra.mxu0 0.0
      %352 = vmatprep.subr.mxu0 0.0
      %353 = vmatpush1.msra.mxu0 0.0
      %354 = vmatprep.subr.mxu0 0.0
      %355 = vmatpush1.msra.mxu0 0.0
      %356 = vmatprep.subr.mxu0 0.0
      %357 = vmatpush1.msra.mxu0 0.0
      %358 = vmatprep.subr.mxu0 0.0
      %359 = vmatpush1.msra.mxu0 0.0
      %360 = vmatprep.subr.mxu0 0.0
      %361 = vmatpush1.msra.mxu0 0.0
      %362 = vmatprep.subr.mxu0 0.0
      %363 = vmatpush1.msra.mxu0 0.0
      %364 = vmatprep.subr.mxu0 0.0
      %365 = vmatpush1.msra.mxu0 0.0
      %366 = vmatprep.subr.mxu0 0.0
      %367 = vmatpush1.msra.mxu0 0.0
      %368 = vmatprep.subr.mxu0 0.0
      %369 = vmatpush1.msra.mxu0 0.0
      %370 = vmatprep.subr.mxu0 0.0
      %371 = vmatpush1.msra.mxu0 0.0
      %372 = vmatprep.subr.mxu0 0.0
      %373 = vmatpush1.msra.mxu0 0.0
      %374 = vmatprep.subr.mxu0 0.0
      %375 = vmatpush1.msra.mxu0 0.0
      %376 = vmatprep.subr.mxu0 0.0
      %377 = vmatpush1.msra.mxu0 0.0
      %378 = vmatprep.subr.mxu0 0.0
      %379 = vmatpush1.msra.mxu0 0.0
      %380 = vmatprep.mubr.f32.mxu0 0.0
      %381 = vmatmul.mubr.f32.gmra.mrb[0].mxu0 %v310
      %v382 = vpop.f32.mrb[0].mxu0
      %v383 = vadd.f32 0.0, %v382
      %v384 = vpop.f32.mrb[0].mxu0
      %385 = vdwg.mxu0
      %386 = vst [vmem:[%s272] sm:$0xff] %v383
      %v387 = vrot.slane %v383, 4
      %v388 = vadd.f32 %v383, %v387
      %v389 = vrot.slane %v388, 2
      %v390 = vadd.f32 %v388, %v389
      %v391 = vrot.slane %v390, 1
      %v392 = vadd.f32 %v390, %v391
      %v393 = vmul.f32 %v383, %v383
      %v394 = vrot.slane %v393, 4
      %v395 = vadd.f32 %v393, %v394
      %v396 = vrot.slane %v395, 2
      %v397 = vadd.f32 %v395, %v396
      %v398 = vrot.slane %v397, 1
      %v399 = vadd.f32 %v397, %v398
      %v400 = vlaneseq
      %v401 = vshrl.u32 %v400, 7
      %vm402 = vcmp.eq.s32.totalorder %v401, 0
      %vm403 = vcmp.eq.s32.totalorder %v401, 1
      %v404 = vsel %vm403, %v399, 0.0
      %v405 = vsel %vm402, %v392, %v404
      %406 = vst [vmem:[%s280] sm:$0xff] %v405
      %p407 = scmp.lt.s32.totalorder %s20, 1
      %s408 = scalar_select %p407, %s20, 1
      %p409 = scmp.lt.s32.totalorder %s21, 1
      %s410 = scalar_select %p409, %s21, 1
      %s411 = smul.addr %s408, 2
      %s412 = sadd.s32 %s410, %s411
      %s413 = smul.addr %s412, 8
      %s414 = scalar_lea.vmem %s3, %s413
      %p415 = scmp.lt.s32.totalorder %s20, 1
      %s416 = scalar_select %p415, %s20, 1
      %p417 = scmp.lt.s32.totalorder %s21, 1
      %s418 = scalar_select %p417, %s21, 1
      %s419 = smul.addr %s416, 2
      %s420 = sadd.s32 %s418, %s419
      %s421 = smul.addr %s420, 8
      %s422 = scalar_lea.vmem %s4, %s421
      // Predicated region
      $region33: #{conv_block_1d.2} parent=31 // pred_check
        %p423 = pneg %p125
      $region34: #{conv_block_1d.2} parent=31 // pred_check_branch
        %425 = sbr.rel (%p423) target = $region36
      $region35: #{conv_block_1d.2} parent=31 // pred_region
        _
      $region36: #{conv_block_1d.2} parent=31 // pred_fallthru
        _
      // Predicated region
      $region37: #{conv_block_1d.2} parent=31 // pred_check
        %p426 = pneg %p153
      $region38: #{conv_block_1d.2} parent=31 // pred_check_branch
        %428 = sbr.rel (%p426) target = $region40
      $region39: #{conv_block_1d.2} parent=31 // pred_region
        _
      $region40: #{conv_block_1d.2} parent=31 // pred_fallthru
        _
    $region32: #{conv_block_1d.2} parent=5 // pred_fallthru
      _
    %p429 = scmp.le.s32.totalorder 2, %s11
    // Predicated region
    $region41: #{conv_block_1d.2} parent=5 // pred_check
      %p430 = pneg %p429
    $region42: #{conv_block_1d.2} parent=5 // pred_check_branch
      %432 = sbr.rel (%p430) target = $region44
    $region43: #{conv_block_1d.2} parent=5 // pred_region
      %s433 = ssub.s32 %s11, 2
      // Predicated region
      $region45: #{conv_block_1d.2} parent=43 // pred_check
        %p434 = pneg %p131
      $region46: #{conv_block_1d.2} parent=43 // pred_check_branch
        %436 = sbr.rel (%p434) target = $region48
      $region47: #{conv_block_1d.2} parent=43 // pred_region
        %p437 = scmp.lt.s32.totalorder %s22, 1
        %s438 = scalar_select %p437, %s22, 1
        %p439 = scmp.lt.s32.totalorder %s23, 1
        %s440 = scalar_select %p439, %s23, 1
        %s441 = smul.addr %s438, 2
        %s442 = sadd.s32 %s440, %s441
        %s443 = smul.addr %s442, 8
        %s444 = scalar_lea.vmem %s3, %s443
      $region48: #{conv_block_1d.2} parent=43 // pred_fallthru
        _
      // Predicated region
      $region49: #{conv_block_1d.2} parent=43 // pred_check
        %p445 = pneg %p159
      $region50: #{conv_block_1d.2} parent=43 // pred_check_branch
        %447 = sbr.rel (%p445) target = $region52
      $region51: #{conv_block_1d.2} parent=43 // pred_region
        %p448 = scmp.lt.s32.totalorder %s22, 1
        %s449 = scalar_select %p448, %s22, 1
        %p450 = scmp.lt.s32.totalorder %s23, 1
        %s451 = scalar_select %p450, %s23, 1
        %s452 = smul.addr %s449, 2
        %s453 = sadd.s32 %s451, %s452
        %s454 = smul.addr %s453, 8
        %s455 = scalar_lea.vmem %s4, %s454
      $region52: #{conv_block_1d.2} parent=43 // pred_fallthru
        _
    $region44: #{conv_block_1d.2} parent=5 // pred_fallthru
      _
  $region6: #{conv_block_1d.2} parent=0 // loop_footer
    %s15 = sadd.s32 1, %s11
  $region7: #{conv_block_1d.2} parent=0 // loop_footer_branch
    %10 = sbr.rel target = $region3
  $region8: #{conv_block_1d.2} parent=0 // loop_exit
    _

</llo_original>
